<compile_context>
chip_gen: v5e
topology: v5e:2x2
jax: 0.10.0
libtpu: 0.0.40
codegen_flags: <defaults>
</compile_context>

<pallas_src>
import functools

import jax
import jax.numpy as jnp
from jax.experimental import pallas as pl


def _attend(q_all, k_all, v_all, bias, wc_ref, bc_ref, out_ref, heads):
    """Shared attention core: per-head scores/softmax/PV + single content matmul.

    q_all: (nq, c), k_all/v_all: (nk, c) with heads packed along lanes,
    bias: (nq, nk) additive batch-block mask (0 same batch, -1e30 otherwise),
    wc_ref: (c, c) = Wc^T, bc_ref: (1, c), out_ref: (nq, c).
    """
    c = q_all.shape[-1]
    hc = c // heads
    outs = []
    for hi in range(heads):                      # static unroll, heads is tiny
        sl = slice(hi * hc, (hi + 1) * hc)
        # Scores for all batch rows at once; contract hc directly (no K^T value).
        s = jax.lax.dot_general(q_all[:, sl], k_all[:, sl],
                                (((1,), (1,)), ((), ())),
                                preferred_element_type=jnp.float32)   # (nq, nk)
        s = s + bias                              # kill cross-batch pairs
        e = jnp.exp(s - jnp.max(s, axis=-1, keepdims=True))
        p = e * (1.0 / jnp.sum(e, axis=-1, keepdims=True))            # exact recip
        outs.append(jnp.dot(p, v_all[:, sl],
                            preferred_element_type=jnp.float32))      # (nq, hc)
    o = jnp.concatenate(outs, axis=-1)            # (nq, c): heads concat on lanes
    y = jnp.dot(o, wc_ref[...], preferred_element_type=jnp.float32) + bc_ref[...]
    out_ref[...] = y.astype(out_ref.dtype)


def _fused_self_attention_kernel(x_ref, bias_ref, wqkv_ref, bqkv_ref,
                                 wc_ref, bc_ref, out_ref, *, heads):
    """Self-attention path: one fused (n, c) @ (c, 3c) QKV projection."""
    c = x_ref.shape[-1]
    qkv = jnp.dot(x_ref[...], wqkv_ref[...],
                  preferred_element_type=jnp.float32) + bqkv_ref[...]   # (n, 3c)
    _attend(qkv[:, :c], qkv[:, c:2 * c], qkv[:, 2 * c:],
            bias_ref[...], wc_ref, bc_ref, out_ref, heads)


def _cross_attention_kernel(xq_ref, xk_ref, xv_ref, bias_ref,
                            wq_ref, bq_ref, wk_ref, bk_ref, wv_ref, bv_ref,
                            wc_ref, bc_ref, out_ref, *, heads):
    """General path (distinct xk / xv): three un-headed projection matmuls."""
    q = jnp.dot(xq_ref[...], wq_ref[...],
                preferred_element_type=jnp.float32) + bq_ref[...]
    k = jnp.dot(xk_ref[...], wk_ref[...],
                preferred_element_type=jnp.float32) + bk_ref[...]
    v = jnp.dot(xv_ref[...], wv_ref[...],
                preferred_element_type=jnp.float32) + bv_ref[...]
    _attend(q, k, v, bias_ref[...], wc_ref, bc_ref, out_ref, heads)


@functools.partial(jax.jit, static_argnames=("heads",))
def attention_forward(params, xq, xk=None, xv=None, *, heads):
    """Mirrors Attention.forward.  xq/xk/xv: (seq, batch, channels) float32."""
    self_attention = xk is None and xv is None
    if xk is None:
        xk = xq
    if xv is None:
        xv = xk

    qs, b, c = xq.shape
    ks = xk.shape[0]
    assert c % heads == 0, "%s MOD %s = %s" % (c, heads, c % heads)
    hc = c // heads
    temperature = 1.0 / (hc ** 0.5)
    nq, nk = qs * b, ks * b

    # Native (seq, batch, c) -> (seq*batch, c): leading-dim collapse, no transpose.
    xq2 = xq.reshape(nq, c)
    xk2 = xk.reshape(nk, c)
    xv2 = xv.reshape(nk, c)

    # Additive mask: rows/cols are token index s*b + bi, so batch id = index % b.
    row_b = jnp.arange(nq, dtype=jnp.int32) % b
    col_b = jnp.arange(nk, dtype=jnp.int32) % b
    bias = jnp.where(row_b[:, None] == col_b[None, :],
                     0.0, -1e30).astype(jnp.float32)                  # (nq, nk)

    # torch Linear: y = x @ W.T + b.  Softmax temperature folded into Q projection.
    wq_t = params["wq"].T * temperature
    bq_r = (params["bq"] * temperature).reshape(1, c)
    wk_t = params["wk"].T
    bk_r = params["bk"].reshape(1, c)
    wv_t = params["wv"].T
    bv_r = params["bv"].reshape(1, c)
    wc_t = params["wc"].T
    bc_r = params["bc"].reshape(1, c)

    # Advisory cost estimate so XLA schedules neighbouring ops sensibly.
    flops = int(2 * (nq + 2 * nk) * c * c          # q/k/v projections
                + 4 * heads * nq * nk * hc         # scores + PV
                + 2 * nq * c * c)                  # content projection
    transcendentals = int(heads * nq * nk)
    bytes_accessed = int(4 * ((2 * nq + 2 * nk) * c + nq * nk + 4 * c * c + 4 * c))
    cost = pl.CostEstimate(flops=flops, transcendentals=transcendentals,
                           bytes_accessed=bytes_accessed)

    out_shape = jax.ShapeDtypeStruct((nq, c), xq.dtype)

    if self_attention:
        w_qkv = jnp.concatenate([wq_t, wk_t, wv_t], axis=1)           # (c, 3c)
        b_qkv = jnp.concatenate([bq_r, bk_r, bv_r], axis=1)           # (1, 3c)
        out2 = pl.pallas_call(
            functools.partial(_fused_self_attention_kernel, heads=heads),
            out_shape=out_shape,
            cost_estimate=cost,
        )(xq2, bias, w_qkv, b_qkv, wc_t, bc_r)
    else:
        out2 = pl.pallas_call(
            functools.partial(_cross_attention_kernel, heads=heads),
            out_shape=out_shape,
            cost_estimate=cost,
        )(xq2, xk2, xv2, bias, wq_t, bq_r, wk_t, bk_r, wv_t, bv_r, wc_t, bc_r)

    # (seq*batch, c) -> (seq, batch, c): matches the torch module's output layout.
    return out2.reshape(qs, b, c)


def reference_forward(params, xq, xk=None, xv=None, *, heads):
    """Plain-JAX replica of the torch forward (dropout = 0)."""
    if xk is None:
        xk = xq
    if xv is None:
        xv = xk
    qs, b, c = xq.shape
    ks = xk.shape[0]
    h = heads
    hc = c // h
    q = (xq @ params["wq"].T + params["bq"]).reshape(qs, b, h, hc)
    k = (xk @ params["wk"].T + params["bk"]).reshape(ks, b, h, hc)
    v = (xv @ params["wv"].T + params["bv"]).reshape(ks, b, h, hc)
    qk = jnp.einsum("sbhc,tbhc->stbh", q, k)
    a = qk * (1.0 / hc ** 0.5)
    p = jax.nn.softmax(a, axis=1)
    x = jnp.einsum("stbh,tbhc->sbhc", p, v).reshape(qs, b, c)
    return x @ params["wc"].T + params["bc"]


def init_params(key, channels):
    """Deterministic Linear-style init (uniform +/- 1/sqrt(fan_in))."""
    bound = 1.0 / (channels ** 0.5)
    keys = jax.random.split(key, 8)
    u = lambda k, shape: jax.random.uniform(
        k, shape, dtype=jnp.float32, minval=-bound, maxval=bound)
    return {
        "wq": u(keys[0], (channels, channels)), "bq": u(keys[1], (channels,)),
        "wk": u(keys[2], (channels, channels)), "bk": u(keys[3], (channels,)),
        "wv": u(keys[4], (channels, channels)), "bv": u(keys[5], (channels,)),
        "wc": u(keys[6], (channels, channels)), "bc": u(keys[7], (channels,)),
    }


if __name__ == "__main__":
    channels = 32
    heads = 4
    seq = 8
    batch = 2

    root = jax.random.PRNGKey(0)
    k_param, k_x, k_xk = jax.random.split(root, 3)
    params = init_params(k_param, channels)

    # xq: (seq, batch, channels) -- matches the torch module's (qs, b, c) convention.
    xq = jax.random.normal(k_x, (seq, batch, channels), dtype=jnp.float32)

    # Self-attention (fused-QKV kernel path).
    out = attention_forward(params, xq, heads=heads)
    out = jax.block_until_ready(out)
    ref = reference_forward(params, xq, heads=heads)
    assert out.shape == (seq, batch, channels)
    assert jnp.allclose(out, ref, rtol=2e-3, atol=2e-3), "self-attention mismatch"

    # Cross-attention (general kernel path; xv defaults to xk as in the module).
    xk = jax.random.normal(k_xk, (seq, batch, channels), dtype=jnp.float32)
    out_x = attention_forward(params, xq, xk, heads=heads)
    out_x = jax.block_until_ready(out_x)
    ref_x = reference_forward(params, xq, xk, heads=heads)
    assert jnp.allclose(out_x, ref_x, rtol=2e-3, atol=2e-3), "cross-attention mismatch"

    print("KERNEL_OK")
</pallas_src>

<mosaic_0001>
module attributes {stable_mosaic.version = 11 : i64} {
  func.func @_fused_self_attention_kernel(%arg0: memref<16x32xf32, #tpu.memory_space<vmem>>, %arg1: memref<16x16xf32, #tpu.memory_space<vmem>>, %arg2: memref<32x96xf32, #tpu.memory_space<vmem>>, %arg3: memref<1x96xf32, #tpu.memory_space<vmem>>, %arg4: memref<32x32xf32, #tpu.memory_space<vmem>>, %arg5: memref<1x32xf32, #tpu.memory_space<vmem>>, %arg6: memref<16x32xf32, #tpu.memory_space<vmem>>) attributes {dimension_semantics = [], scalar_prefetch = 0 : i64, scratch_operands = 0 : i64, tpu.core_type = #tpu.core_type<tc>} {
    %c0 = arith.constant 0 : index
    %c0_0 = arith.constant 0 : index
    %0 = vector.load %arg0[%c0, %c0_0] : memref<16x32xf32, #tpu.memory_space<vmem>>, vector<16x32xf32>
    %c0_1 = arith.constant 0 : index
    %c0_2 = arith.constant 0 : index
    %1 = vector.load %arg2[%c0_1, %c0_2] : memref<32x96xf32, #tpu.memory_space<vmem>>, vector<32x96xf32>
    %cst = arith.constant dense<0.000000e+00> : vector<16x96xf32>
    %2 = tpu.matmul %0, %1, %cst {dimension_numbers = #tpu.dot_dimension_numbers<[1], [0], [0], [1], [0, 0, 1, 1], [], []>} : vector<16x32xf32>, vector<32x96xf32>, vector<16x96xf32> -> vector<16x96xf32>
    %c0_3 = arith.constant 0 : index
    %c0_4 = arith.constant 0 : index
    %3 = vector.load %arg3[%c0_3, %c0_4] : memref<1x96xf32, #tpu.memory_space<vmem>>, vector<1x96xf32>
    %4 = vector.broadcast %3 : vector<1x96xf32> to vector<16x96xf32>
    %5 = arith.addf %2, %4 : vector<16x96xf32>
    %6 = vector.extract_strided_slice %5 {offsets = [0, 0], sizes = [16, 32], strides = [1, 1]} : vector<16x96xf32> to vector<16x32xf32>
    %7 = vector.extract_strided_slice %5 {offsets = [0, 32], sizes = [16, 32], strides = [1, 1]} : vector<16x96xf32> to vector<16x32xf32>
    %8 = vector.extract_strided_slice %5 {offsets = [0, 64], sizes = [16, 32], strides = [1, 1]} : vector<16x96xf32> to vector<16x32xf32>
    %c0_5 = arith.constant 0 : index
    %c0_6 = arith.constant 0 : index
    %9 = vector.load %arg1[%c0_5, %c0_6] : memref<16x16xf32, #tpu.memory_space<vmem>>, vector<16x16xf32>
    %10 = vector.extract_strided_slice %6 {offsets = [0, 0], sizes = [16, 8], strides = [1, 1]} : vector<16x32xf32> to vector<16x8xf32>
    %11 = vector.extract_strided_slice %7 {offsets = [0, 0], sizes = [16, 8], strides = [1, 1]} : vector<16x32xf32> to vector<16x8xf32>
    %cst_7 = arith.constant dense<0.000000e+00> : vector<16x16xf32>
    %12 = tpu.matmul %10, %11, %cst_7 {dimension_numbers = #tpu.dot_dimension_numbers<[1], [1], [0], [0], [0, 0, 1, 0], [], []>} : vector<16x8xf32>, vector<16x8xf32>, vector<16x16xf32> -> vector<16x16xf32>
    %13 = arith.addf %12, %9 : vector<16x16xf32>
    %cst_8 = arith.constant dense<0xFF800000> : vector<16xf32>
    %14 = vector.multi_reduction <maximumf>, %13, %cst_8 [1] : vector<16x16xf32> to vector<16xf32>
    %15 = vector.shape_cast %14 : vector<16xf32> to vector<16x1xf32>
    %16 = vector.broadcast %15 : vector<16x1xf32> to vector<16x16xf32>
    %17 = arith.subf %13, %16 : vector<16x16xf32>
    %18 = math.exp %17 : vector<16x16xf32>
    %cst_9 = arith.constant dense<0.000000e+00> : vector<16xf32>
    %19 = vector.multi_reduction <add>, %18, %cst_9 [1] : vector<16x16xf32> to vector<16xf32>
    %20 = vector.shape_cast %19 : vector<16xf32> to vector<16x1xf32>
    %cst_10 = arith.constant 1.000000e+00 : f32
    %21 = vector.broadcast %cst_10 : f32 to vector<16x1xf32>
    %22 = arith.divf %21, %20 : vector<16x1xf32>
    %23 = vector.broadcast %22 : vector<16x1xf32> to vector<16x16xf32>
    %24 = arith.mulf %18, %23 : vector<16x16xf32>
    %25 = vector.extract_strided_slice %8 {offsets = [0, 0], sizes = [16, 8], strides = [1, 1]} : vector<16x32xf32> to vector<16x8xf32>
    %cst_11 = arith.constant dense<0.000000e+00> : vector<16x8xf32>
    %26 = tpu.matmul %24, %25, %cst_11 {dimension_numbers = #tpu.dot_dimension_numbers<[1], [0], [0], [1], [0, 0, 1, 1], [], []>} : vector<16x16xf32>, vector<16x8xf32>, vector<16x8xf32> -> vector<16x8xf32>
    %27 = vector.extract_strided_slice %6 {offsets = [0, 8], sizes = [16, 8], strides = [1, 1]} : vector<16x32xf32> to vector<16x8xf32>
    %28 = vector.extract_strided_slice %7 {offsets = [0, 8], sizes = [16, 8], strides = [1, 1]} : vector<16x32xf32> to vector<16x8xf32>
    %cst_12 = arith.constant dense<0.000000e+00> : vector<16x16xf32>
    %29 = tpu.matmul %27, %28, %cst_12 {dimension_numbers = #tpu.dot_dimension_numbers<[1], [1], [0], [0], [0, 0, 1, 0], [], []>} : vector<16x8xf32>, vector<16x8xf32>, vector<16x16xf32> -> vector<16x16xf32>
    %30 = arith.addf %29, %9 : vector<16x16xf32>
    %cst_13 = arith.constant dense<0xFF800000> : vector<16xf32>
    %31 = vector.multi_reduction <maximumf>, %30, %cst_13 [1] : vector<16x16xf32> to vector<16xf32>
    %32 = vector.shape_cast %31 : vector<16xf32> to vector<16x1xf32>
    %33 = vector.broadcast %32 : vector<16x1xf32> to vector<16x16xf32>
    %34 = arith.subf %30, %33 : vector<16x16xf32>
    %35 = math.exp %34 : vector<16x16xf32>
    %cst_14 = arith.constant dense<0.000000e+00> : vector<16xf32>
    %36 = vector.multi_reduction <add>, %35, %cst_14 [1] : vector<16x16xf32> to vector<16xf32>
    %37 = vector.shape_cast %36 : vector<16xf32> to vector<16x1xf32>
    %cst_15 = arith.constant 1.000000e+00 : f32
    %38 = vector.broadcast %cst_15 : f32 to vector<16x1xf32>
    %39 = arith.divf %38, %37 : vector<16x1xf32>
    %40 = vector.broadcast %39 : vector<16x1xf32> to vector<16x16xf32>
    %41 = arith.mulf %35, %40 : vector<16x16xf32>
    %42 = vector.extract_strided_slice %8 {offsets = [0, 8], sizes = [16, 8], strides = [1, 1]} : vector<16x32xf32> to vector<16x8xf32>
    %cst_16 = arith.constant dense<0.000000e+00> : vector<16x8xf32>
    %43 = tpu.matmul %41, %42, %cst_16 {dimension_numbers = #tpu.dot_dimension_numbers<[1], [0], [0], [1], [0, 0, 1, 1], [], []>} : vector<16x16xf32>, vector<16x8xf32>, vector<16x8xf32> -> vector<16x8xf32>
    %44 = vector.extract_strided_slice %6 {offsets = [0, 16], sizes = [16, 8], strides = [1, 1]} : vector<16x32xf32> to vector<16x8xf32>
    %45 = vector.extract_strided_slice %7 {offsets = [0, 16], sizes = [16, 8], strides = [1, 1]} : vector<16x32xf32> to vector<16x8xf32>
    %cst_17 = arith.constant dense<0.000000e+00> : vector<16x16xf32>
    %46 = tpu.matmul %44, %45, %cst_17 {dimension_numbers = #tpu.dot_dimension_numbers<[1], [1], [0], [0], [0, 0, 1, 0], [], []>} : vector<16x8xf32>, vector<16x8xf32>, vector<16x16xf32> -> vector<16x16xf32>
    %47 = arith.addf %46, %9 : vector<16x16xf32>
    %cst_18 = arith.constant dense<0xFF800000> : vector<16xf32>
    %48 = vector.multi_reduction <maximumf>, %47, %cst_18 [1] : vector<16x16xf32> to vector<16xf32>
    %49 = vector.shape_cast %48 : vector<16xf32> to vector<16x1xf32>
    %50 = vector.broadcast %49 : vector<16x1xf32> to vector<16x16xf32>
    %51 = arith.subf %47, %50 : vector<16x16xf32>
    %52 = math.exp %51 : vector<16x16xf32>
    %cst_19 = arith.constant dense<0.000000e+00> : vector<16xf32>
    %53 = vector.multi_reduction <add>, %52, %cst_19 [1] : vector<16x16xf32> to vector<16xf32>
    %54 = vector.shape_cast %53 : vector<16xf32> to vector<16x1xf32>
    %cst_20 = arith.constant 1.000000e+00 : f32
    %55 = vector.broadcast %cst_20 : f32 to vector<16x1xf32>
    %56 = arith.divf %55, %54 : vector<16x1xf32>
    %57 = vector.broadcast %56 : vector<16x1xf32> to vector<16x16xf32>
    %58 = arith.mulf %52, %57 : vector<16x16xf32>
    %59 = vector.extract_strided_slice %8 {offsets = [0, 16], sizes = [16, 8], strides = [1, 1]} : vector<16x32xf32> to vector<16x8xf32>
    %cst_21 = arith.constant dense<0.000000e+00> : vector<16x8xf32>
    %60 = tpu.matmul %58, %59, %cst_21 {dimension_numbers = #tpu.dot_dimension_numbers<[1], [0], [0], [1], [0, 0, 1, 1], [], []>} : vector<16x16xf32>, vector<16x8xf32>, vector<16x8xf32> -> vector<16x8xf32>
    %61 = vector.extract_strided_slice %6 {offsets = [0, 24], sizes = [16, 8], strides = [1, 1]} : vector<16x32xf32> to vector<16x8xf32>
    %62 = vector.extract_strided_slice %7 {offsets = [0, 24], sizes = [16, 8], strides = [1, 1]} : vector<16x32xf32> to vector<16x8xf32>
    %cst_22 = arith.constant dense<0.000000e+00> : vector<16x16xf32>
    %63 = tpu.matmul %61, %62, %cst_22 {dimension_numbers = #tpu.dot_dimension_numbers<[1], [1], [0], [0], [0, 0, 1, 0], [], []>} : vector<16x8xf32>, vector<16x8xf32>, vector<16x16xf32> -> vector<16x16xf32>
    %64 = arith.addf %63, %9 : vector<16x16xf32>
    %cst_23 = arith.constant dense<0xFF800000> : vector<16xf32>
    %65 = vector.multi_reduction <maximumf>, %64, %cst_23 [1] : vector<16x16xf32> to vector<16xf32>
    %66 = vector.shape_cast %65 : vector<16xf32> to vector<16x1xf32>
    %67 = vector.broadcast %66 : vector<16x1xf32> to vector<16x16xf32>
    %68 = arith.subf %64, %67 : vector<16x16xf32>
    %69 = math.exp %68 : vector<16x16xf32>
    %cst_24 = arith.constant dense<0.000000e+00> : vector<16xf32>
    %70 = vector.multi_reduction <add>, %69, %cst_24 [1] : vector<16x16xf32> to vector<16xf32>
    %71 = vector.shape_cast %70 : vector<16xf32> to vector<16x1xf32>
    %cst_25 = arith.constant 1.000000e+00 : f32
    %72 = vector.broadcast %cst_25 : f32 to vector<16x1xf32>
    %73 = arith.divf %72, %71 : vector<16x1xf32>
    %74 = vector.broadcast %73 : vector<16x1xf32> to vector<16x16xf32>
    %75 = arith.mulf %69, %74 : vector<16x16xf32>
    %76 = vector.extract_strided_slice %8 {offsets = [0, 24], sizes = [16, 8], strides = [1, 1]} : vector<16x32xf32> to vector<16x8xf32>
    %cst_26 = arith.constant dense<0.000000e+00> : vector<16x8xf32>
    %77 = tpu.matmul %75, %76, %cst_26 {dimension_numbers = #tpu.dot_dimension_numbers<[1], [0], [0], [1], [0, 0, 1, 1], [], []>} : vector<16x16xf32>, vector<16x8xf32>, vector<16x8xf32> -> vector<16x8xf32>
    %78 = tpu.concatenate %26, %43, %60, %77 in 1 : vector<16x8xf32>, vector<16x8xf32>, vector<16x8xf32>, vector<16x8xf32> -> vector<16x32xf32>
    %c0_27 = arith.constant 0 : index
    %c0_28 = arith.constant 0 : index
    %79 = vector.load %arg4[%c0_27, %c0_28] : memref<32x32xf32, #tpu.memory_space<vmem>>, vector<32x32xf32>
    %cst_29 = arith.constant dense<0.000000e+00> : vector<16x32xf32>
    %80 = tpu.matmul %78, %79, %cst_29 {dimension_numbers = #tpu.dot_dimension_numbers<[1], [0], [0], [1], [0, 0, 1, 1], [], []>} : vector<16x32xf32>, vector<32x32xf32>, vector<16x32xf32> -> vector<16x32xf32>
    %c0_30 = arith.constant 0 : index
    %c0_31 = arith.constant 0 : index
    %81 = vector.load %arg5[%c0_30, %c0_31] : memref<1x32xf32, #tpu.memory_space<vmem>>, vector<1x32xf32>
    %82 = vector.broadcast %81 : vector<1x32xf32> to vector<16x32xf32>
    %83 = arith.addf %80, %82 : vector<16x32xf32>
    %c0_32 = arith.constant 0 : index
    %c0_33 = arith.constant 0 : index
    %84 = vector.load %arg6[%c0_32, %c0_33] : memref<16x32xf32, #tpu.memory_space<vmem>>, vector<16x32xf32>
    tpu.vector_store %arg6[%c0_32, %c0_33], %83 {strides = array<i32>} : memref<16x32xf32, #tpu.memory_space<vmem>>, vector<16x32xf32>,
    return
  }
}

</mosaic_0001>

<llo_original>
// kernel: attention_forward.1
$region0: #{attention_forward.1}
  #allocation0 [shape = 'u32[]', space=smem, size = 0x4, offset = 0x4, fixed_abs, tag = 'smem constant byte address 0x4 - core index']
  #allocation1 [shape = 'u32[72,128]{1,0:T(1,128)}', space=vmem, size = 0x9000, scoped, tag = 'internal scratch']
  %s0 = inlined_call_operand.vmem [shape: f32[16,32], index: 0, kind: input, shape index: {}]
  %s1 = inlined_call_operand.vmem [shape: f32[16,16], index: 1, kind: input, shape index: {}]
  %s2 = inlined_call_operand.vmem [shape: f32[32,96], index: 2, kind: input, shape index: {}]
  %s3 = inlined_call_operand.vmem [shape: f32[1,96], index: 3, kind: input, shape index: {}]
  %s4 = inlined_call_operand.vmem [shape: f32[32,32], index: 4, kind: input, shape index: {}]
  %s5 = inlined_call_operand.vmem [shape: f32[1,32], index: 5, kind: input, shape index: {}]
  %s6 = inlined_call_operand.hbm [shape: f32[16,32], index: 6, kind: output, shape index: {}]
  %s7 = sld [smem:[#allocation0]]
  $region34: #{attention_forward.1} parent=0
    _
  %s9 = ssub.s32 1, %s7
  %s10 = scalar_select 0, %s9, %s7
  $region1: #{attention_forward.1} parent=0
    #allocation2 [shape = 'u8[8192]{0}', space=vmem, size = 0x2000, scoped, tag = 'output window, operand 0, single buffered']
    #allocation3 [shape = 's32[1]{0}', space=sflag, size = 0x4, scoped, tag = 'scoped memory for attention_forward.1']
    %11 = vsyncpa [#allocation3], 0
    // Predicated region
    $region2: #{attention_forward.1} parent=1 // pred_check
      _
    $region3: #{attention_forward.1} parent=1 // pred_check_branch
      %13 = sbr.rel (0) target = $region5
    $region4: #{attention_forward.1} parent=1 // pred_region
      _
    $region5: #{attention_forward.1} parent=1 // pred_fallthru
      _
    // Predicated region
    $region6: #{attention_forward.1} parent=1 // pred_check
      _
    $region7: #{attention_forward.1} parent=1 // pred_check_branch
      %15 = sbr.rel (0) target = $region9
    $region8: #{attention_forward.1} parent=1 // pred_region
      _
    $region9: #{attention_forward.1} parent=1 // pred_fallthru
      _
    // Predicated region
    $region10: #{attention_forward.1} parent=1 // pred_check
      _
    $region11: #{attention_forward.1} parent=1 // pred_check_branch
      %17 = sbr.rel (0) target = $region13
    $region12: #{attention_forward.1} parent=1 // pred_region
      _
    $region13: #{attention_forward.1} parent=1 // pred_fallthru
      _
    // Predicated region
    $region14: #{attention_forward.1} parent=1 // pred_check
      _
    $region15: #{attention_forward.1} parent=1 // pred_check_branch
      %19 = sbr.rel (0) target = $region17
    $region16: #{attention_forward.1} parent=1 // pred_region
      _
    $region17: #{attention_forward.1} parent=1 // pred_fallthru
      _
    // Predicated region
    $region18: #{attention_forward.1} parent=1 // pred_check
      _
    $region19: #{attention_forward.1} parent=1 // pred_check_branch
      %21 = sbr.rel (0) target = $region21
    $region20: #{attention_forward.1} parent=1 // pred_region
      _
    $region21: #{attention_forward.1} parent=1 // pred_fallthru
      _
    // Predicated region
    $region22: #{attention_forward.1} parent=1 // pred_check
      _
    $region23: #{attention_forward.1} parent=1 // pred_check_branch
      %23 = sbr.rel (0) target = $region25
    $region24: #{attention_forward.1} parent=1 // pred_region
      _
    $region25: #{attention_forward.1} parent=1 // pred_fallthru
      _
    %v24 = vld [vmem:[%s0] sm:$0xff]
    %v25 = vld [vmem:[%s0 + $0x8] sm:$0xff]
    %v26 = vld [vmem:[%s2] sm:$0xff]
    %v27 = vld [vmem:[%s2 + $0x8] sm:$0xff]
    %v28 = vld [vmem:[%s2 + $0x10] sm:$0xff]
    %v29 = vld [vmem:[%s2 + $0x18] sm:$0xff]
    %v30 = vld [vmem:[%s3] sm:$0x1]
    %v32 = vperm.slane %v30, 0
    %vm34 = vcmask 261120
    %v36 = vsel %vm34, %v24, 0
    %v39 = vsel %vm34, %v25, 0
    %41 = vmatpush.msra.mxu0 0.0
    %42 = vmatpush.msra.mxu0 0.0
    %43 = vmatpush.msra.mxu0 0.0
    %44 = vmatpush.msra.mxu0 0.0
    %45 = vmatpush.msra.mxu0 0.0
    %46 = vmatpush.msra.mxu0 0.0
    %47 = vmatpush.msra.mxu0 0.0
    %48 = vmatpush.msra.mxu0 0.0
    %49 = vmatpush.msra.mxu0 0.0
    %50 = vmatpush.msra.mxu0 0.0
    %51 = vmatpush.msra.mxu0 0.0
    %52 = vmatpush.msra.mxu0 0.0
    %53 = vmatpush.msra.mxu0 %v29
    %54 = vmatpush.msra.mxu0 %v28
    %55 = vmatpush.msra.mxu0 %v27
    %56 = vmatpush.msra.mxu0 %v26
    %57 = vmatmul.f32.gmra.mxu0 %v36
    %v58 = vpop.f32.mrf.mxu0
    %v59 = vadd.f32 %v32, %v58
    %60 = vmatmul.f32.gmra.mxu0 %v39
    %v61 = vpop.f32.mrf.mxu0
    %v62 = vadd.f32 %v32, %v61
    %63 = vdwg.mxu0
    %v64 = vld [vmem:[%s1] sm:$0xff]
    %v65 = vld [vmem:[%s1 + $0x8] sm:$0xff]
    %68 = vrot.lane.b32.xlu0 %v59, 96
    %v69 = vpop.permute.xlu0 %68
    %70 = vrot.lane.b32.xlu0 %v62, 96
    %v71 = vpop.permute.xlu0 %70
    %vm72 = vcmask 64512
    %v73 = vsel %vm72, %v59, 0
    %v75 = vsel %vm72, %v62, 0
    %v77 = vsel %vm72, %v69, 0
    %v79 = vsel %vm72, %v71, 0
    %81 = vmatpush.xpose.msra.mxu0 0.0
    %82 = vmatpush.xpose.msra.mxu0 0.0
    %83 = vmatpush.xpose.msra.mxu0 0.0
    %84 = vmatpush.xpose.msra.mxu0 0.0
    %85 = vmatpush.xpose.msra.mxu0 0.0
    %86 = vmatpush.xpose.msra.mxu0 0.0
    %87 = vmatpush.xpose.msra.mxu0 0.0
    %88 = vmatpush.xpose.msra.mxu0 0.0
    %89 = vmatpush.xpose.msra.mxu0 0.0
    %90 = vmatpush.xpose.msra.mxu0 0.0
    %91 = vmatpush.xpose.msra.mxu0 0.0
    %92 = vmatpush.xpose.msra.mxu0 0.0
    %93 = vmatpush.xpose.msra.mxu0 0.0
    %94 = vmatpush.xpose.msra.mxu0 0.0
    %95 = vmatpush.xpose.msra.mxu0 %v79
    %96 = vmatpush.xpose.msra.mxu0 %v77
    %97 = vmatmul.f32.gmra.mxu0 %v73
    %v98 = vpop.f32.mrf.mxu0
    %v99 = vadd.f32 %v64, %v98
    %100 = vmatmul.f32.gmra.mxu0 %v75
    %v101 = vpop.f32.mrf.mxu0
    %v102 = vadd.f32 %v65, %v101
    %103 = vdwg.mxu0
    %vm104 = vcmask 130048
    %v105 = vsel %vm104, %v99, -inf
    %106 = vmax.xlane.f32.xlu0 %v105
    %v107 = vpop.xlane.xlu0 %106
    %v108 = vsel %vm104, %v102, -inf
    %109 = vmax.xlane.f32.xlu0 %v108
    %v110 = vpop.xlane.xlu0 %109
    %v111 = vsub.f32 %v99, %v107
    %v112 = vsub.f32 %v102, %v110
    %v113 = vmul.f32 %v111, 1.442695
    %v114 = vpow.pop %v113
    %v115 = vmul.f32 %v112, 1.442695
    %v116 = vpow.pop %v115
    %v117 = vsel %vm104, %v114, 0.0
    %118 = vadd.xlane.f32.xlu0 %v117
    %v119 = vpop.xlane.xlu0 %118
    %v120 = vsel %vm104, %v116, 0.0
    %121 = vadd.xlane.f32.xlu0 %v120
    %v122 = vpop.xlane.xlu0 %121
    %v123 = vrcp.pop %v119
    %v124 = vmul.f32 %v119, %v123
    %v125 = vsub.f32 1.0, %v124
    %v126 = vmul.f32 %v123, %v125
    %v127 = vadd.f32 %v123, %v126
    %vm128 = vweird.f32 %v119
    %vm129 = vweird.f32 %v123
    %vm130 = vmor %vm128, %vm129
    %v131 = vsel %vm130, %v123, %v127
    %v132 = vand.u32 2147483647, %v119
    %vm133 = vcmp.eq.f32.partialorder %v132, 8.507059e+37
    %v134 = vand.u32 %v119, 2147483648
    %v135 = vor.u32 1.1754944e-38, %v134
    %v136 = vsel %vm133, %v135, %v131
    %v137 = vmul.f32 1.0, %v136
    %v138 = vrcp.pop %v122
    %v139 = vmul.f32 %v122, %v138
    %v140 = vsub.f32 1.0, %v139
    %v141 = vmul.f32 %v138, %v140
    %v142 = vadd.f32 %v138, %v141
    %vm143 = vweird.f32 %v122
    %vm144 = vweird.f32 %v138
    %vm145 = vmor %vm143, %vm144
    %v146 = vsel %vm145, %v138, %v142
    %v147 = vand.u32 2147483647, %v122
    %vm148 = vcmp.eq.f32.partialorder %v147, 8.507059e+37
    %v149 = vand.u32 %v122, 2147483648
    %v150 = vor.u32 1.1754944e-38, %v149
    %v151 = vsel %vm148, %v150, %v146
    %v152 = vmul.f32 1.0, %v151
    %v153 = vmul.f32 %v114, %v137
    %v154 = vmul.f32 %v116, %v152
    %155 = vrot.lane.b32.xlu0 %v59, 64
    %v156 = vpop.permute.xlu0 %155
    %157 = vrot.lane.b32.xlu0 %v62, 64
    %v158 = vpop.permute.xlu0 %157
    %v162 = vsel %vm104, %v153, 0
    %v165 = vsel %vm104, %v154, 0
    %167 = vmatpush.msra.mxu0 0.0
    %168 = vmatpush.msra.mxu0 0.0
    %169 = vmatpush.msra.mxu0 0.0
    %170 = vmatpush.msra.mxu0 0.0
    %171 = vmatpush.msra.mxu0 0.0
    %172 = vmatpush.msra.mxu0 0.0
    %173 = vmatpush.msra.mxu0 0.0
    %174 = vmatpush.msra.mxu0 0.0
    %175 = vmatpush.msra.mxu0 0.0
    %176 = vmatpush.msra.mxu0 0.0
    %177 = vmatpush.msra.mxu0 0.0
    %178 = vmatpush.msra.mxu0 0.0
    %179 = vmatpush.msra.mxu0 0.0
    %180 = vmatpush.msra.mxu0 0.0
    %181 = vmatpush.msra.mxu0 %v158
    %182 = vmatpush.msra.mxu0 %v156
    %183 = vmatmul.f32.gmra.mxu0 %v162
    %v184 = vpop.f32.mrf.mxu0
    %v185 = vadd.f32 0.0, %v184
    %186 = vmatmul.f32.gmra.mxu0 %v165
    %v187 = vpop.f32.mrf.mxu0
    %v188 = vadd.f32 0.0, %v187
    %189 = vdwg.mxu0
    %190 = vrot.lane.b32.xlu0 %v59, 120
    %v191 = vpop.permute.xlu0 %190
    %192 = vrot.lane.b32.xlu0 %v62, 120
    %v193 = vpop.permute.xlu0 %192
    %194 = vrot.lane.b32.xlu0 %v59, 88
    %v195 = vpop.permute.xlu0 %194
    %196 = vrot.lane.b32.xlu0 %v62, 88
    %v197 = vpop.permute.xlu0 %196
    %v198 = vsel %vm72, %v191, 0
    %v200 = vsel %vm72, %v193, 0
    %v202 = vsel %vm72, %v195, 0
    %v204 = vsel %vm72, %v197, 0
    %206 = vmatpush.xpose.msra.mxu0 0.0
    %207 = vmatpush.xpose.msra.mxu0 0.0
    %208 = vmatpush.xpose.msra.mxu0 0.0
    %209 = vmatpush.xpose.msra.mxu0 0.0
    %210 = vmatpush.xpose.msra.mxu0 0.0
    %211 = vmatpush.xpose.msra.mxu0 0.0
    %212 = vmatpush.xpose.msra.mxu0 0.0
    %213 = vmatpush.xpose.msra.mxu0 0.0
    %214 = vmatpush.xpose.msra.mxu0 0.0
    %215 = vmatpush.xpose.msra.mxu0 0.0
    %216 = vmatpush.xpose.msra.mxu0 0.0
    %217 = vmatpush.xpose.msra.mxu0 0.0
    %218 = vmatpush.xpose.msra.mxu0 0.0
    %219 = vmatpush.xpose.msra.mxu0 0.0
    %220 = vmatpush.xpose.msra.mxu0 %v204
    %221 = vmatpush.xpose.msra.mxu0 %v202
    %222 = vmatmul.f32.gmra.mxu0 %v198
    %v223 = vpop.f32.mrf.mxu0
    %v224 = vadd.f32 %v64, %v223
    %225 = vmatmul.f32.gmra.mxu0 %v200
    %v226 = vpop.f32.mrf.mxu0
    %v227 = vadd.f32 %v65, %v226
    %228 = vdwg.mxu0
    %v229 = vsel %vm104, %v224, -inf
    %230 = vmax.xlane.f32.xlu0 %v229
    %v231 = vpop.xlane.xlu0 %230
    %v232 = vsel %vm104, %v227, -inf
    %233 = vmax.xlane.f32.xlu0 %v232
    %v234 = vpop.xlane.xlu0 %233
    %v235 = vsub.f32 %v224, %v231
    %v236 = vsub.f32 %v227, %v234
    %v237 = vmul.f32 %v235, 1.442695
    %v238 = vpow.pop %v237
    %v239 = vmul.f32 %v236, 1.442695
    %v240 = vpow.pop %v239
    %v241 = vsel %vm104, %v238, 0.0
    %242 = vadd.xlane.f32.xlu0 %v241
    %v243 = vpop.xlane.xlu0 %242
    %v244 = vsel %vm104, %v240, 0.0
    %245 = vadd.xlane.f32.xlu0 %v244
    %v246 = vpop.xlane.xlu0 %245
    %v247 = vrcp.pop %v243
    %v248 = vmul.f32 %v243, %v247
    %v249 = vsub.f32 1.0, %v248
    %v250 = vmul.f32 %v247, %v249
    %v251 = vadd.f32 %v247, %v250
    %vm252 = vweird.f32 %v243
    %vm253 = vweird.f32 %v247
    %vm254 = vmor %vm252, %vm253
    %v255 = vsel %vm254, %v247, %v251
    %v256 = vand.u32 2147483647, %v243
    %vm257 = vcmp.eq.f32.partialorder %v256, 8.507059e+37
    %v258 = vand.u32 %v243, 2147483648
    %v259 = vor.u32 1.1754944e-38, %v258
    %v260 = vsel %vm257, %v259, %v255
    %v261 = vmul.f32 1.0, %v260
    %v262 = vrcp.pop %v246
    %v263 = vmul.f32 %v246, %v262
    %v264 = vsub.f32 1.0, %v263
    %v265 = vmul.f32 %v262, %v264
    %v266 = vadd.f32 %v262, %v265
    %vm267 = vweird.f32 %v246
    %vm268 = vweird.f32 %v262
    %vm269 = vmor %vm267, %vm268
    %v270 = vsel %vm269, %v262, %v266
    %v271 = vand.u32 2147483647, %v246
    %vm272 = vcmp.eq.f32.partialorder %v271, 8.507059e+37
    %v273 = vand.u32 %v246, 2147483648
    %v274 = vor.u32 1.1754944e-38, %v273
    %v275 = vsel %vm272, %v274, %v270
    %v276 = vmul.f32 1.0, %v275
    %v277 = vmul.f32 %v238, %v261
    %v278 = vmul.f32 %v240, %v276
    %279 = vrot.lane.b32.xlu0 %v59, 56
    %v280 = vpop.permute.xlu0 %279
    %281 = vrot.lane.b32.xlu0 %v62, 56
    %v282 = vpop.permute.xlu0 %281
    %v286 = vsel %vm104, %v277, 0
    %v289 = vsel %vm104, %v278, 0
    %291 = vmatpush.msra.mxu0 0.0
    %292 = vmatpush.msra.mxu0 0.0
    %293 = vmatpush.msra.mxu0 0.0
    %294 = vmatpush.msra.mxu0 0.0
    %295 = vmatpush.msra.mxu0 0.0
    %296 = vmatpush.msra.mxu0 0.0
    %297 = vmatpush.msra.mxu0 0.0
    %298 = vmatpush.msra.mxu0 0.0
    %299 = vmatpush.msra.mxu0 0.0
    %300 = vmatpush.msra.mxu0 0.0
    %301 = vmatpush.msra.mxu0 0.0
    %302 = vmatpush.msra.mxu0 0.0
    %303 = vmatpush.msra.mxu0 0.0
    %304 = vmatpush.msra.mxu0 0.0
    %305 = vmatpush.msra.mxu0 %v282
    %306 = vmatpush.msra.mxu0 %v280
    %307 = vmatmul.f32.gmra.mxu0 %v286
    %v308 = vpop.f32.mrf.mxu0
    %v309 = vadd.f32 0.0, %v308
    %310 = vmatmul.f32.gmra.mxu0 %v289
    %v311 = vpop.f32.mrf.mxu0
    %v312 = vadd.f32 0.0, %v311
    %313 = vdwg.mxu0
    %314 = vrot.lane.b32.xlu0 %v59, 112
    %v315 = vpop.permute.xlu0 %314
    %316 = vrot.lane.b32.xlu0 %v62, 112
    %v317 = vpop.permute.xlu0 %316
    %318 = vrot.lane.b32.xlu0 %v59, 80
    %v319 = vpop.permute.xlu0 %318
    %320 = vrot.lane.b32.xlu0 %v62, 80
    %v321 = vpop.permute.xlu0 %320
    %v322 = vsel %vm72, %v315, 0
    %v324 = vsel %vm72, %v317, 0
    %v326 = vsel %vm72, %v319, 0
    %v328 = vsel %vm72, %v321, 0
    %330 = vmatpush.xpose.msra.mxu0 0.0
    %331 = vmatpush.xpose.msra.mxu0 0.0
    %332 = vmatpush.xpose.msra.mxu0 0.0
    %333 = vmatpush.xpose.msra.mxu0 0.0
    %334 = vmatpush.xpose.msra.mxu0 0.0
    %335 = vmatpush.xpose.msra.mxu0 0.0
    %336 = vmatpush.xpose.msra.mxu0 0.0
    %337 = vmatpush.xpose.msra.mxu0 0.0
    %338 = vmatpush.xpose.msra.mxu0 0.0
    %339 = vmatpush.xpose.msra.mxu0 0.0
    %340 = vmatpush.xpose.msra.mxu0 0.0
    %341 = vmatpush.xpose.msra.mxu0 0.0
    %342 = vmatpush.xpose.msra.mxu0 0.0
    %343 = vmatpush.xpose.msra.mxu0 0.0
    %344 = vmatpush.xpose.msra.mxu0 %v328
    %345 = vmatpush.xpose.msra.mxu0 %v326
    %346 = vmatmul.f32.gmra.mxu0 %v322
    %v347 = vpop.f32.mrf.mxu0
    %v348 = vadd.f32 %v64, %v347
    %349 = vmatmul.f32.gmra.mxu0 %v324
    %v350 = vpop.f32.mrf.mxu0
    %v351 = vadd.f32 %v65, %v350
    %352 = vdwg.mxu0
    %v353 = vsel %vm104, %v348, -inf
    %354 = vmax.xlane.f32.xlu0 %v353
    %v355 = vpop.xlane.xlu0 %354
    %v356 = vsel %vm104, %v351, -inf
    %357 = vmax.xlane.f32.xlu0 %v356
    %v358 = vpop.xlane.xlu0 %357
    %v359 = vsub.f32 %v348, %v355
    %v360 = vsub.f32 %v351, %v358
    %v361 = vmul.f32 %v359, 1.442695
    %v362 = vpow.pop %v361
    %v363 = vmul.f32 %v360, 1.442695
    %v364 = vpow.pop %v363
    %v365 = vsel %vm104, %v362, 0.0
    %366 = vadd.xlane.f32.xlu0 %v365
    %v367 = vpop.xlane.xlu0 %366
    %v368 = vsel %vm104, %v364, 0.0
    %369 = vadd.xlane.f32.xlu0 %v368
    %v370 = vpop.xlane.xlu0 %369
    %v371 = vrcp.pop %v367
    %v372 = vmul.f32 %v367, %v371
    %v373 = vsub.f32 1.0, %v372
    %v374 = vmul.f32 %v371, %v373
    %v375 = vadd.f32 %v371, %v374
    %vm376 = vweird.f32 %v367
    %vm377 = vweird.f32 %v371
    %vm378 = vmor %vm376, %vm377
    %v379 = vsel %vm378, %v371, %v375
    %v380 = vand.u32 2147483647, %v367
    %vm381 = vcmp.eq.f32.partialorder %v380, 8.507059e+37
    %v382 = vand.u32 %v367, 2147483648
    %v383 = vor.u32 1.1754944e-38, %v382
    %v384 = vsel %vm381, %v383, %v379
    %v385 = vmul.f32 1.0, %v384
    %v386 = vrcp.pop %v370
    %v387 = vmul.f32 %v370, %v386
    %v388 = vsub.f32 1.0, %v387
    %v389 = vmul.f32 %v386, %v388
    %v390 = vadd.f32 %v386, %v389
    %vm391 = vweird.f32 %v370
    %vm392 = vweird.f32 %v386
    %vm393 = vmor %vm391, %vm392
    %v394 = vsel %vm393, %v386, %v390
    %v395 = vand.u32 2147483647, %v370
    %vm396 = vcmp.eq.f32.partialorder %v395, 8.507059e+37
    %v397 = vand.u32 %v370, 2147483648
    %v398 = vor.u32 1.1754944e-38, %v397
    %v399 = vsel %vm396, %v398, %v394
    %v400 = vmul.f32 1.0, %v399
    %v401 = vmul.f32 %v362, %v385
    %v402 = vmul.f32 %v364, %v400
    %403 = vrot.lane.b32.xlu0 %v59, 48
    %v404 = vpop.permute.xlu0 %403
    %405 = vrot.lane.b32.xlu0 %v62, 48
    %v406 = vpop.permute.xlu0 %405
    %v410 = vsel %vm104, %v401, 0
    %v413 = vsel %vm104, %v402, 0
    %415 = vmatpush.msra.mxu0 0.0
    %416 = vmatpush.msra.mxu0 0.0
    %417 = vmatpush.msra.mxu0 0.0
    %418 = vmatpush.msra.mxu0 0.0
    %419 = vmatpush.msra.mxu0 0.0
    %420 = vmatpush.msra.mxu0 0.0
    %421 = vmatpush.msra.mxu0 0.0
    %422 = vmatpush.msra.mxu0 0.0
    %423 = vmatpush.msra.mxu0 0.0
    %424 = vmatpush.msra.mxu0 0.0
    %425 = vmatpush.msra.mxu0 0.0
    %426 = vmatpush.msra.mxu0 0.0
    %427 = vmatpush.msra.mxu0 0.0
    %428 = vmatpush.msra.mxu0 0.0
    %429 = vmatpush.msra.mxu0 %v406
    %430 = vmatpush.msra.mxu0 %v404
    %431 = vmatmul.f32.gmra.mxu0 %v410
    %v432 = vpop.f32.mrf.mxu0
    %v433 = vadd.f32 0.0, %v432
    %434 = vmatmul.f32.gmra.mxu0 %v413
    %v435 = vpop.f32.mrf.mxu0
    %v436 = vadd.f32 0.0, %v435
    %437 = vdwg.mxu0
    %438 = vrot.lane.b32.xlu0 %v59, 104
    %v439 = vpop.permute.xlu0 %438
    %440 = vrot.lane.b32.xlu0 %v62, 104
    %v441 = vpop.permute.xlu0 %440
    %442 = vrot.lane.b32.xlu0 %v59, 72
    %v443 = vpop.permute.xlu0 %442
    %444 = vrot.lane.b32.xlu0 %v62, 72
    %v445 = vpop.permute.xlu0 %444
    %v446 = vsel %vm72, %v439, 0
    %v448 = vsel %vm72, %v441, 0
    %v450 = vsel %vm72, %v443, 0
    %v452 = vsel %vm72, %v445, 0
    %454 = vmatpush.xpose.msra.mxu0 0.0
    %455 = vmatpush.xpose.msra.mxu0 0.0
    %456 = vmatpush.xpose.msra.mxu0 0.0
    %457 = vmatpush.xpose.msra.mxu0 0.0
    %458 = vmatpush.xpose.msra.mxu0 0.0
    %459 = vmatpush.xpose.msra.mxu0 0.0
    %460 = vmatpush.xpose.msra.mxu0 0.0
    %461 = vmatpush.xpose.msra.mxu0 0.0
    %462 = vmatpush.xpose.msra.mxu0 0.0
    %463 = vmatpush.xpose.msra.mxu0 0.0
    %464 = vmatpush.xpose.msra.mxu0 0.0
    %465 = vmatpush.xpose.msra.mxu0 0.0
    %466 = vmatpush.xpose.msra.mxu0 0.0
    %467 = vmatpush.xpose.msra.mxu0 0.0
    %468 = vmatpush.xpose.msra.mxu0 %v452
    %469 = vmatpush.xpose.msra.mxu0 %v450
    %470 = vmatmul.f32.gmra.mxu0 %v446
    %v471 = vpop.f32.mrf.mxu0
    %v472 = vadd.f32 %v64, %v471
    %473 = vmatmul.f32.gmra.mxu0 %v448
    %v474 = vpop.f32.mrf.mxu0
    %v475 = vadd.f32 %v65, %v474
    %476 = vdwg.mxu0
    %v477 = vsel %vm104, %v472, -inf
    %478 = vmax.xlane.f32.xlu0 %v477
    %v479 = vpop.xlane.xlu0 %478
    %v480 = vsel %vm104, %v475, -inf
    %481 = vmax.xlane.f32.xlu0 %v480
    %v482 = vpop.xlane.xlu0 %481
    %v483 = vsub.f32 %v472, %v479
    %v484 = vsub.f32 %v475, %v482
    %v485 = vmul.f32 %v483, 1.442695
    %v486 = vpow.pop %v485
    %v487 = vmul.f32 %v484, 1.442695
    %v488 = vpow.pop %v487
    %v489 = vsel %vm104, %v486, 0.0
    %490 = vadd.xlane.f32.xlu0 %v489
    %v491 = vpop.xlane.xlu0 %490
    %v492 = vsel %vm104, %v488, 0.0
    %493 = vadd.xlane.f32.xlu0 %v492
    %v494 = vpop.xlane.xlu0 %493
    %v495 = vrcp.pop %v491
    %v496 = vmul.f32 %v491, %v495
    %v497 = vsub.f32 1.0, %v496
    %v498 = vmul.f32 %v495, %v497
    %v499 = vadd.f32 %v495, %v498
    %vm500 = vweird.f32 %v491
    %vm501 = vweird.f32 %v495
    %vm502 = vmor %vm500, %vm501
    %v503 = vsel %vm502, %v495, %v499
    %v504 = vand.u32 2147483647, %v491
    %vm505 = vcmp.eq.f32.partialorder %v504, 8.507059e+37
    %v506 = vand.u32 %v491, 2147483648
    %v507 = vor.u32 1.1754944e-38, %v506
    %v508 = vsel %vm505, %v507, %v503
    %v509 = vmul.f32 1.0, %v508
    %v510 = vrcp.pop %v494
    %v511 = vmul.f32 %v494, %v510
    %v512 = vsub.f32 1.0, %v511
    %v513 = vmul.f32 %v510, %v512
    %v514 = vadd.f32 %v510, %v513
    %vm515 = vweird.f32 %v494
    %vm516 = vweird.f32 %v510
    %vm517 = vmor %vm515, %vm516
    %v518 = vsel %vm517, %v510, %v514
    %v519 = vand.u32 2147483647, %v494
    %vm520 = vcmp.eq.f32.partialorder %v519, 8.507059e+37
    %v521 = vand.u32 %v494, 2147483648
    %v522 = vor.u32 1.1754944e-38, %v521
    %v523 = vsel %vm520, %v522, %v518
    %v524 = vmul.f32 1.0, %v523
    %v525 = vmul.f32 %v486, %v509
    %v526 = vmul.f32 %v488, %v524
    %527 = vrot.lane.b32.xlu0 %v59, 40
    %v528 = vpop.permute.xlu0 %527
    %529 = vrot.lane.b32.xlu0 %v62, 40
    %v530 = vpop.permute.xlu0 %529
    %v534 = vsel %vm104, %v525, 0
    %v537 = vsel %vm104, %v526, 0
    %539 = vmatpush.msra.mxu0 0.0
    %540 = vmatpush.msra.mxu0 0.0
    %541 = vmatpush.msra.mxu0 0.0
    %542 = vmatpush.msra.mxu0 0.0
    %543 = vmatpush.msra.mxu0 0.0
    %544 = vmatpush.msra.mxu0 0.0
    %545 = vmatpush.msra.mxu0 0.0
    %546 = vmatpush.msra.mxu0 0.0
    %547 = vmatpush.msra.mxu0 0.0
    %548 = vmatpush.msra.mxu0 0.0
    %549 = vmatpush.msra.mxu0 0.0
    %550 = vmatpush.msra.mxu0 0.0
    %551 = vmatpush.msra.mxu0 0.0
    %552 = vmatpush.msra.mxu0 0.0
    %553 = vmatpush.msra.mxu0 %v530
    %554 = vmatpush.msra.mxu0 %v528
    %555 = vmatmul.f32.gmra.mxu0 %v534
    %v556 = vpop.f32.mrf.mxu0
    %v557 = vadd.f32 0.0, %v556
    %558 = vmatmul.f32.gmra.mxu0 %v537
    %v559 = vpop.f32.mrf.mxu0
    %v560 = vadd.f32 0.0, %v559
    %561 = vdwg.mxu0
    %564 = vrot.lane.b32.xlu0 %v309, 8
    %v565 = vpop.permute.xlu0 %564
    %566 = vrot.lane.b32.xlu0 %v312, 8
    %v567 = vpop.permute.xlu0 %566
    %572 = vrot.lane.b32.xlu0 %v433, 16
    %v573 = vpop.permute.xlu0 %572
    %574 = vrot.lane.b32.xlu0 %v436, 16
    %v575 = vpop.permute.xlu0 %574
    %580 = vrot.lane.b32.xlu0 %v557, 24
    %v581 = vpop.permute.xlu0 %580
    %582 = vrot.lane.b32.xlu0 %v560, 24
    %v583 = vpop.permute.xlu0 %582
    %v586 = vsel %vm72, %v185, %v565
    %v587 = vsel %vm72, %v188, %v567
    %v588 = vsel %vm104, %v586, %v573
    %v589 = vsel %vm104, %v587, %v575
    %vm590 = vcmask 195584
    %v591 = vsel %vm590, %v588, %v581
    %v592 = vsel %vm590, %v589, %v583
    %v593 = vld [vmem:[%s4] sm:$0xff]
    %v594 = vld [vmem:[%s4 + $0x8] sm:$0xff]
    %v595 = vld [vmem:[%s4 + $0x10] sm:$0xff]
    %v596 = vld [vmem:[%s4 + $0x18] sm:$0xff]
    %v597 = vld [vmem:[%s5] sm:$0x1]
    %v599 = vperm.slane %v597, 0
    %v602 = vsel %vm34, %v591, 0
    %v605 = vsel %vm34, %v592, 0
    %607 = vmatpush.msra.mxu0 0.0
    %608 = vmatpush.msra.mxu0 0.0
    %609 = vmatpush.msra.mxu0 0.0
    %610 = vmatpush.msra.mxu0 0.0
    %611 = vmatpush.msra.mxu0 0.0
    %612 = vmatpush.msra.mxu0 0.0
    %613 = vmatpush.msra.mxu0 0.0
    %614 = vmatpush.msra.mxu0 0.0
    %615 = vmatpush.msra.mxu0 0.0
    %616 = vmatpush.msra.mxu0 0.0
    %617 = vmatpush.msra.mxu0 0.0
    %618 = vmatpush.msra.mxu0 0.0
    %619 = vmatpush.msra.mxu0 %v596
    %620 = vmatpush.msra.mxu0 %v595
    %621 = vmatpush.msra.mxu0 %v594
    %622 = vmatpush.msra.mxu0 %v593
    %623 = vmatmul.f32.gmra.mxu0 %v602
    %v624 = vpop.f32.mrf.mxu0
    %v625 = vadd.f32 %v599, %v624
    %626 = vmatmul.f32.gmra.mxu0 %v605
    %v627 = vpop.f32.mrf.mxu0
    %v628 = vadd.f32 %v599, %v627
    %629 = vdwg.mxu0
    %630 = vst.msk [vmem:[#allocation2] sm:$0xff] %vm34, %v625
    %631 = vst.msk [vmem:[#allocation2 + $0x8] sm:$0xff] %vm34, %v628
    // Predicated region
    $region26: #{attention_forward.1} parent=1 // pred_check
      _
    $region27: #{attention_forward.1} parent=1 // pred_check_branch
      %633 = sbr.rel (0) target = $region29
    $region28: #{attention_forward.1} parent=1 // pred_region
      %635 = vsyncadd [#allocation3], 0
      %s636 = sshll.u32 [#allocation2], 4
      %s637 = int_to_ptr.vmem [resolvable:$true] %s636
      %s638 = sshll.u32 %s6, 4
      %s639 = int_to_ptr.hbm [resolvable:$true] %s638
      %644 = dma.vmem_to_hbm [thread:$0]  %s637, 256, %s639, [#allocation3], 128, 128, 8
    $region29: #{attention_forward.1} parent=1 // pred_fallthru
      _
    // Predicated region
    $region30: #{attention_forward.1} parent=1 // pred_check
      _
    $region31: #{attention_forward.1} parent=1 // pred_check_branch
      %646 = sbr.rel (0) target = $region33
    $region32: #{attention_forward.1} parent=1 // pred_region
      %648 = dma.done [#allocation3], 256
    $region33: #{attention_forward.1} parent=1 // pred_fallthru
      _
    %649 = vsyncpa [#allocation3], 1

</llo_original>
